<compile_context>
chip_gen: v7x
topology: tpu7x:2x2x1
jax: 0.10.0
libtpu: 0.0.40
codegen_flags: <defaults>
</compile_context>

<pallas_src>
import jax
import jax.numpy as jnp
from jax.experimental import pallas as pl
from jax.experimental.pallas import tpu as pltpu

_LANE = 128
_SUBLANE = 8


def _overlap_kernel(scal_ref, x_ref, o_ref):
    # scal_ref: (2,) f32 in SMEM -> [beta, c]
    # x_ref:    (tb, tl) channel-0 tile in VMEM
    # o_ref:    (tb, tl) output tile in VMEM
    beta = scal_ref[0]
    c = scal_ref[1]
    v = x_ref[...]
    o_ref[...] = beta * v * v + c          # 2 vmul + 1 vadd per element (VPU)


def _pick_tile(n, unit, max_tile):
    """Largest multiple of `unit` that divides `n` and is <= max_tile.

    If `n` is not a multiple of `unit`, return the full extent `n`
    (full-extent blocks are always legal per the (8,128) BlockSpec rule).
    """
    if n % unit != 0:
        return n
    best = unit
    t = unit
    while t <= max_tile and t <= n:
        if n % t == 0:
            best = t
        t += unit
    return best


def _overlap_pallas(x, scal):
    """x: (B, C, H, W) f32; scal: (2,) f32 = [beta, c].  Returns (B, H, W)."""
    B, C, H, W = x.shape
    L = H * W

    # Free reshape: channel 0 of batch b lives in columns [0, L) of row b.
    # Gridding only over those columns means only channel-0 bytes are DMA'd.
    x2 = x.reshape(B, C * L)

    # Lane-dense, VMEM-bounded tiles.  Worst case tb=64, tl=4096 f32:
    # (in + out) x double-buffer = 4 MiB, far under v7x's 32 MiB scoped VMEM.
    tl = _pick_tile(L, _LANE, 4096)         # multiple of 128
    tb = _pick_tile(B, _SUBLANE, 64)        # multiple of 8, or full B

    grid = (B // tb, L // tl)

    bytes_io = 2 * B * L * x.dtype.itemsize          # channel-0 in + y out
    cost = pl.CostEstimate(flops=3 * B * L, transcendentals=0,
                           bytes_accessed=bytes_io)

    out2 = pl.pallas_call(
        _overlap_kernel,
        out_shape=jax.ShapeDtypeStruct((B, L), x.dtype),
        grid_spec=pl.GridSpec(
            grid=grid,
            in_specs=[
                pl.BlockSpec(memory_space=pltpu.SMEM),          # [beta, c]
                pl.BlockSpec((tb, tl), lambda i, j: (i, j)),    # ch-0 cols only
            ],
            out_specs=pl.BlockSpec((tb, tl), lambda i, j: (i, j)),
        ),
        compiler_params=pltpu.CompilerParams(
            dimension_semantics=("parallel", "parallel")),
        cost_estimate=cost,
    )(scal, x2)
    return out2.reshape(B, H, W)


def overlap_forward(x, beta, c, constant=True, use_pallas=None):
    """x: (B, C, H, W) float32. beta, c: scalar. Returns (B, H, W)."""
    B, C, H, W = x.shape
    L = H * W
    beta = jnp.asarray(beta, x.dtype).reshape(())
    # Frozen-zero parameter when constant=False: additive term is exactly 0.
    c_eff = (jnp.asarray(c, x.dtype).reshape(()) if constant
             else jnp.zeros((), x.dtype))

    if use_pallas is None:
        # Tiny problems are launch/step-overhead bound; let XLA fuse them.
        use_pallas = (B * L >= 64 * 1024)
    if L % _LANE != 0:
        # TODO(synk): pad/ragged handling for H*W not a multiple of 128.
        use_pallas = False

    if not use_pallas:
        return beta * x[:, 0] ** 2 + c_eff

    scal = jnp.stack([beta, c_eff]).astype(jnp.float32)
    return _overlap_pallas(x, scal)


if __name__ == "__main__":
    key = jax.random.PRNGKey(0)
    kx, kb, kc, kx2 = jax.random.split(key, 4)

    # Small shapes consistent with the module (tensor with a channel axis).
    B, C, H, W = 2, 4, 16, 16
    x = jax.random.normal(kx, (B, C, H, W), dtype=jnp.float32)

    # Deterministic parameter init (analogue of torch.rand(1) with seed 0).
    beta = jax.random.uniform(kb, (), dtype=jnp.float32)
    c = jax.random.uniform(kc, (), dtype=jnp.float32)
    constant = True

    # Force the Pallas path so the kernel itself is exercised.
    y = overlap_forward(x, beta, c, constant=constant, use_pallas=True)
    y = jax.block_until_ready(y)
    y_ref = beta * x[:, 0] ** 2 + (c if constant else 0.0)
    assert y.shape == (B, H, W)
    assert jnp.allclose(y, y_ref, rtol=1e-6, atol=1e-6)

    # Also exercise a multi-tile pipelined grid and the constant=False branch.
    B2, C2, H2, W2 = 8, 4, 64, 128
    x2 = jax.random.normal(kx2, (B2, C2, H2, W2), dtype=jnp.float32)
    y2 = overlap_forward(x2, beta, c, constant=False, use_pallas=True)
    y2 = jax.block_until_ready(y2)
    y2_ref = beta * x2[:, 0] ** 2
    assert y2.shape == (B2, H2, W2)
    assert jnp.allclose(y2, y2_ref, rtol=1e-6, atol=1e-6)

    print("KERNEL_OK")
</pallas_src>

<mosaic_0001>
module attributes {stable_mosaic.version = 11 : i64} {
  func.func @_overlap_kernel(%arg0: i32, %arg1: i32, %arg2: memref<2xf32, #tpu.memory_space<smem>>, %arg3: memref<2x256xf32, #tpu.memory_space<vmem>>, %arg4: memref<2x256xf32, #tpu.memory_space<vmem>>) attributes {dimension_semantics = [#tpu.dimension_semantics<parallel>, #tpu.dimension_semantics<parallel>], iteration_bounds = array<i64: 1, 1>, scalar_prefetch = 0 : i64, scratch_operands = 0 : i64, tpu.core_type = #tpu.core_type<tc>, window_params = [{transform_indices = @transform_0, window_bounds = array<i64: 2>}, {transform_indices = @transform_1, window_bounds = array<i64: 2, 256>}, {transform_indices = @transform_2, window_bounds = array<i64: 2, 256>}]} {
    %c0 = arith.constant 0 : index
    %0 = memref.load %arg2[%c0] : memref<2xf32, #tpu.memory_space<smem>>
    %c1 = arith.constant 1 : index
    %1 = memref.load %arg2[%c1] : memref<2xf32, #tpu.memory_space<smem>>
    %c0_0 = arith.constant 0 : index
    %c0_1 = arith.constant 0 : index
    %2 = vector.load %arg3[%c0_0, %c0_1] : memref<2x256xf32, #tpu.memory_space<vmem>>, vector<2x256xf32>
    %3 = vector.broadcast %0 : f32 to vector<2x256xf32>
    %4 = arith.mulf %3, %2 : vector<2x256xf32>
    %5 = arith.mulf %4, %2 : vector<2x256xf32>
    %6 = vector.broadcast %1 : f32 to vector<2x256xf32>
    %7 = arith.addf %5, %6 : vector<2x256xf32>
    %c0_2 = arith.constant 0 : index
    %c0_3 = arith.constant 0 : index
    %8 = vector.load %arg4[%c0_2, %c0_3] : memref<2x256xf32, #tpu.memory_space<vmem>>, vector<2x256xf32>
    tpu.vector_store %arg4[%c0_2, %c0_3], %7 {strides = array<i32>} : memref<2x256xf32, #tpu.memory_space<vmem>>, vector<2x256xf32>,
    return
  }
  func.func @transform_0(%arg0: i32, %arg1: i32) -> i32 {
    %c0_i32 = arith.constant 0 : i32
    %c0_i32_0 = arith.constant 0 : i32
    return %c0_i32 : i32
  }
  func.func @transform_1(%arg0: i32, %arg1: i32) -> (i32, i32) {
    %c0_i32 = arith.constant 0 : i32
    return %arg0, %arg1 : i32, i32
  }
  func.func @transform_2(%arg0: i32, %arg1: i32) -> (i32, i32) {
    %c0_i32 = arith.constant 0 : i32
    return %arg0, %arg1 : i32, i32
  }
}

</mosaic_0001>

<llo_original>
// kernel: tpu_custom_call.1
$region0: #{tpu_custom_call.1}
  #allocation0 [shape = 'u32[]', space=smem, size = 0x4, offset = 0x4, fixed_abs, tag = 'smem constant byte address 0x4 - core index']
  #allocation1 [shape = 'u32[144,128]{1,0:T(1,128)}', space=vmem, size = 0x12000, scoped, tag = 'internal scratch']
  %s0 = inlined_call_operand.hbm [shape: f32[2], index: 0, kind: input, shape index: {}]
  %s1 = inlined_call_operand.hbm [shape: f32[2,1024], index: 1, kind: input, shape index: {}]
  %s2 = inlined_call_operand.hbm [shape: f32[2,256], index: 2, kind: output, shape index: {}]
  %s3 = sld [smem:[#allocation0]]
  $region26: #{tpu_custom_call.1} parent=0
    _
  %s5 = ssub.s32 1, %s3
  %s6 = scalar_select 0, %s5, %s3
  $region1: #{tpu_custom_call.1} parent=0
    #allocation2 [shape = 'u8[512]{0}', space=smem, size = 0x200, scoped, tag = 'input window, operand 0, single buffered']
    #allocation3 [shape = 's32[1]{0}', space=sflag, size = 0x4, scoped, tag = 'scoped memory for tpu_custom_call.1']
    #allocation4 [shape = 's32[1]{0}', space=sflag, size = 0x4, scoped, tag = 'scoped memory for tpu_custom_call.1']
    #allocation5 [shape = 's32[1]{0}', space=sflag, size = 0x4, scoped, tag = 'scoped memory for tpu_custom_call.1']
    #allocation6 [shape = 'u8[2048]{0}', space=vmem, size = 0x800, scoped, tag = 'input window, operand 1, single buffered']
    #allocation7 [shape = 'u8[2048]{0}', space=vmem, size = 0x800, scoped, tag = 'output window, operand 0, single buffered']
    %7 = vsyncpa [#allocation5], 0
    %8 = vsyncpa [#allocation3], 0
    %9 = vsyncpa [#allocation4], 0
    // Predicated region
    $region2: #{tpu_custom_call.1} parent=1 // pred_check
      _
    $region3: #{tpu_custom_call.1} parent=1 // pred_check_branch
      %11 = sbr.rel (0) target = $region5
    $region4: #{tpu_custom_call.1} parent=1 // pred_region
      %s13 = ssub.s32 16, 16
      %14 = vsyncadd [#allocation5], %s13
      %17 = dma.hbm_to_smem %s0, 16, [#allocation2], [#allocation5]
    $region5: #{tpu_custom_call.1} parent=1 // pred_fallthru
      _
    // Predicated region
    $region6: #{tpu_custom_call.1} parent=1 // pred_check
      _
    $region7: #{tpu_custom_call.1} parent=1 // pred_check_branch
      %19 = sbr.rel (0) target = $region9
    $region8: #{tpu_custom_call.1} parent=1 // pred_region
      %s21 = ssub.s32 64, 64
      %22 = vsyncadd [#allocation3], %s21
      %s24 = sshll.u32 [#allocation6], 4
      %s25 = int_to_ptr.vmem [resolvable:$true] %s24
      %27 = dma.hbm_to_vmem [thread:$0]  %s1, 64, %s25, [#allocation3]
    $region9: #{tpu_custom_call.1} parent=1 // pred_fallthru
      _
    // Predicated region
    $region10: #{tpu_custom_call.1} parent=1 // pred_check
      _
    $region11: #{tpu_custom_call.1} parent=1 // pred_check_branch
      %29 = sbr.rel (0) target = $region13
    $region12: #{tpu_custom_call.1} parent=1 // pred_region
      %30 = dma.done [#allocation5], 16
    $region13: #{tpu_custom_call.1} parent=1 // pred_fallthru
      _
    // Predicated region
    $region14: #{tpu_custom_call.1} parent=1 // pred_check
      _
    $region15: #{tpu_custom_call.1} parent=1 // pred_check_branch
      %32 = sbr.rel (0) target = $region17
    $region16: #{tpu_custom_call.1} parent=1 // pred_region
      %33 = dma.done [#allocation3], 64
    $region17: #{tpu_custom_call.1} parent=1 // pred_fallthru
      _
    %34 = sfence
    %s35 = sld [smem:[#allocation2]]
    %s36 = sld [smem:[#allocation2 + $0x1]]
    %v37 = vld [vmem:[#allocation6] sm:$0xf]
    %v38 = vstv %s35
    %v39 = vmul.f32 %v38, %v37
    %v40 = vmul.f32 %v39, %v37
    %v41 = vstv %s36
    %v42 = vadd.f32 %v40, %v41
    %43 = vst [vmem:[#allocation7] sm:$0xf] %v42
    // Predicated region
    $region18: #{tpu_custom_call.1} parent=1 // pred_check
      _
    $region19: #{tpu_custom_call.1} parent=1 // pred_check_branch
      %45 = sbr.rel (0) target = $region21
    $region20: #{tpu_custom_call.1} parent=1 // pred_region
      %s47 = ssub.s32 64, 64
      %48 = vsyncadd [#allocation4], %s47
      %s50 = sshll.u32 [#allocation7], 4
      %s51 = int_to_ptr.vmem [resolvable:$true] %s50
      %53 = dma.vmem_to_hbm [thread:$0]  %s51, 64, %s2, [#allocation4]
    $region21: #{tpu_custom_call.1} parent=1 // pred_fallthru
      _
    // Predicated region
    $region22: #{tpu_custom_call.1} parent=1 // pred_check
      _
    $region23: #{tpu_custom_call.1} parent=1 // pred_check_branch
      %55 = sbr.rel (0) target = $region25
    $region24: #{tpu_custom_call.1} parent=1 // pred_region
      %56 = dma.done [#allocation4], 64
    $region25: #{tpu_custom_call.1} parent=1 // pred_fallthru
      _
    %57 = vsyncpa [#allocation3], 1
    %58 = vsyncpa [#allocation4], 1
    %59 = vsyncpa [#allocation5], 1

</llo_original>
